<compile_context>
chip_gen: v7x
topology: tpu7x:2x2x1
jax: 0.10.0
libtpu: 0.0.40
codegen_flags: <defaults>
</compile_context>

<pallas_src>
import numpy as np

import jax
import jax.numpy as jnp
from jax.experimental import pallas as pl
from jax.experimental.pallas import tpu as pltpu


def _decomp_kernel(w_ref, x_ref, sea_ref, mean_ref):
    # w_ref:   (L, L)    combined averaging matrix (compute dtype, resident)
    # x_ref:   (TB, L, TC) input block; time on sublanes, channels lane-dense
    # outputs: (TB, L, TC)
    w = w_ref[...]
    tb = x_ref.shape[0]
    for b in range(tb):  # static, small unroll over batch slots in the block
        xb = x_ref[b]                                                  # (L, TC)
        mean = jnp.dot(w, xb, preferred_element_type=jnp.float32)     # MXU, f32 acc
        sea = xb.astype(jnp.float32) - mean                           # f32 subtract
        mean_ref[b] = mean.astype(mean_ref.dtype)                     # cast at store
        sea_ref[b] = sea.astype(sea_ref.dtype)


def _build_weight_matrix(L, kernel_sizes, dtype):
    """Combined (L, L) averaging matrix: W = (1/n) * sum_k A_k, where A_k applies
    the stride-1, edge-replicate-padded moving average of size k along time."""
    n = len(kernel_sizes)
    W = np.zeros((L, L), dtype=np.float64)
    idx = np.arange(L)
    for k in kernel_sizes:
        pad = (k - 1) // 2
        for off in range(-pad, -pad + k):
            cols = np.clip(idx + off, 0, L - 1)  # edge replication
            W[idx, cols] += 1.0 / k
    W /= n
    return jnp.asarray(W, dtype=dtype)


_VMEM_BUDGET = 40 * 1024 * 1024  # conservative: v7x has 64 MiB physical VMEM per TC


def _choose_tiles(B, L, C, x_itemsize, w_bytes):
    """Pick (TB, TC) so the per-step VMEM working set stays under budget while each
    DMA is large enough to amortize per-grid-step overhead."""
    c_cap = ((C + 127) // 128) * 128  # no point in a tile wider than round_up(C, 128)

    def step_bytes(tb, tc):
        io = 3 * 2 * tb * L * tc * x_itemsize   # x / sea / mean blocks, double-buffered
        tmp = 3 * L * tc * 4                    # in-kernel f32 temporaries
        return 2 * w_bytes + io + tmp           # W (pipeline allocates 2 buffers)

    tc = 128
    for cand in (512, 256, 128):
        if cand <= max(c_cap, 128) and step_bytes(1, cand) <= _VMEM_BUDGET:
            tc = cand
            break

    tb = 1
    while (tb * 2 <= B
           and tb * L * tc * x_itemsize < (1 << 20)          # grow blocks toward ~1 MiB DMAs
           and step_bytes(tb * 2, tc) <= _VMEM_BUDGET):
        tb *= 2
    return tb, tc, step_bytes(tb, tc)


def series_decomp_multi(x, kernel_sizes):
    """x: (B, L, C) -> (sea, moving_mean), both (B, L, C), same dtype as x."""
    kernel_sizes = tuple(int(k) for k in kernel_sizes)
    for k in kernel_sizes:
        if k < 1 or k % 2 == 0:
            raise ValueError(
                "series_decomp_multi: only odd kernel sizes preserve the sequence "
                f"length with (k-1)//2 edge padding; got {k}."
            )

    B, L, C = x.shape
    # bf16 feeds the MXU natively; keep W in f32 for f32 inputs (weight precision).
    compute_dtype = jnp.bfloat16 if x.dtype == jnp.dtype(jnp.bfloat16) else jnp.float32
    W = _build_weight_matrix(L, kernel_sizes, compute_dtype)
    w_bytes = L * L * jnp.dtype(compute_dtype).itemsize

    TB, TC, est_bytes = _choose_tiles(B, L, C, jnp.dtype(x.dtype).itemsize, w_bytes)
    grid = (pl.cdiv(B, TB), pl.cdiv(C, TC))
    vmem_limit = int(min(max(est_bytes + (8 << 20), 32 << 20), 64 << 20))

    sea, mean = pl.pallas_call(
        _decomp_kernel,
        out_shape=(
            jax.ShapeDtypeStruct((B, L, C), x.dtype),
            jax.ShapeDtypeStruct((B, L, C), x.dtype),
        ),
        grid=grid,
        in_specs=[
            # Constant index map: never re-DMA'd after the first step.
            pl.BlockSpec((L, L), lambda b, c: (0, 0)),
            pl.BlockSpec((TB, L, TC), lambda b, c: (b, 0, c)),
        ],
        out_specs=(
            pl.BlockSpec((TB, L, TC), lambda b, c: (b, 0, c)),
            pl.BlockSpec((TB, L, TC), lambda b, c: (b, 0, c)),
        ),
        compiler_params=pltpu.CompilerParams(
            dimension_semantics=("parallel", "parallel"),
            vmem_limit_bytes=vmem_limit,
        ),
    )(W, x)
    return sea, mean


def _reference(x, kernel_sizes):
    # pure-JAX reference mirroring the PyTorch forward
    means = []
    L = x.shape[1]
    for k in kernel_sizes:
        pad = (k - 1) // 2
        xp = jnp.concatenate(
            [jnp.repeat(x[:, :1, :], pad, axis=1), x, jnp.repeat(x[:, -1:, :], pad, axis=1)],
            axis=1,
        )
        wins = jnp.stack([xp[:, j: j + L, :] for j in range(k)], axis=0)
        means.append(wins.mean(axis=0))
    mean = sum(means) / len(means)
    seas = [x - m for m in means]
    sea = sum(seas) / len(seas)
    return sea, mean


if __name__ == "__main__":
    # Small shapes consistent with the module: (batch, seq_len, channels)
    B, L, C = 2, 8, 4
    kernel_sizes = (3, 5)  # odd kernel sizes (required for shape-preserving decomposition)

    key = jax.random.PRNGKey(0)
    x = jax.random.normal(key, (B, L, C), dtype=jnp.float32)

    # f32 path (C=4 exercises the ragged / masked-store channel tile).
    sea, mean = series_decomp_multi(x, kernel_sizes)
    sea = jax.block_until_ready(sea)
    mean = jax.block_until_ready(mean)

    sea_ref, mean_ref = _reference(x, kernel_sizes)
    assert sea.shape == (B, L, C) and mean.shape == (B, L, C)
    assert jnp.allclose(mean, mean_ref, atol=1e-5, rtol=1e-5)
    assert jnp.allclose(sea, sea_ref, atol=1e-5, rtol=1e-5)

    # bf16 path: x and W go to the MXU in bf16 with f32 accumulation.
    x_bf = x.astype(jnp.bfloat16)
    sea_bf, mean_bf = series_decomp_multi(x_bf, kernel_sizes)
    sea_bf = jax.block_until_ready(sea_bf)
    mean_bf = jax.block_until_ready(mean_bf)
    assert sea_bf.dtype == jnp.bfloat16 and mean_bf.dtype == jnp.bfloat16
    assert bool(jnp.all(jnp.isfinite(sea_bf.astype(jnp.float32))))
    assert bool(jnp.all(jnp.isfinite(mean_bf.astype(jnp.float32))))

    print("KERNEL_OK")
</pallas_src>

<mosaic_0001>
module attributes {stable_mosaic.version = 11 : i64} {
  func.func @_decomp_kernel(%arg0: i32, %arg1: i32, %arg2: memref<8x8xf32, #tpu.memory_space<vmem>>, %arg3: memref<2x8x128xf32, #tpu.memory_space<vmem>>, %arg4: memref<2x8x128xf32, #tpu.memory_space<vmem>>, %arg5: memref<2x8x128xf32, #tpu.memory_space<vmem>>) attributes {dimension_semantics = [#tpu.dimension_semantics<parallel>, #tpu.dimension_semantics<parallel>], iteration_bounds = array<i64: 1, 1>, scalar_prefetch = 0 : i64, scratch_operands = 0 : i64, tpu.core_type = #tpu.core_type<tc>, window_params = [{pipeline_mode = #tpu.pipeline_mode<synchronous>, transform_indices = @transform_0, window_bounds = array<i64: 8, 8>}, {transform_indices = @transform_1, window_bounds = array<i64: 2, 8, 128>}, {transform_indices = @transform_2, window_bounds = array<i64: 2, 8, 128>}, {transform_indices = @transform_3, window_bounds = array<i64: 2, 8, 128>}]} {
    %c0 = arith.constant 0 : index
    %c0_0 = arith.constant 0 : index
    %0 = vector.load %arg2[%c0, %c0_0] : memref<8x8xf32, #tpu.memory_space<vmem>>, vector<8x8xf32>
    %c0_1 = arith.constant 0 : index
    %c0_2 = arith.constant 0 : index
    %c0_3 = arith.constant 0 : index
    %1 = vector.load %arg3[%c0_1, %c0_2, %c0_3] : memref<2x8x128xf32, #tpu.memory_space<vmem>>, vector<1x8x128xf32>
    %2 = vector.shape_cast %1 : vector<1x8x128xf32> to vector<8x128xf32>
    %cst = arith.constant dense<0.000000e+00> : vector<8x128xf32>
    %3 = tpu.matmul %0, %2, %cst {dimension_numbers = #tpu.dot_dimension_numbers<[1], [0], [0], [1], [0, 0, 1, 1], [], []>} : vector<8x8xf32>, vector<8x128xf32>, vector<8x128xf32> -> vector<8x128xf32>
    %4 = arith.subf %2, %3 : vector<8x128xf32>
    %c0_4 = arith.constant 0 : index
    %c0_5 = arith.constant 0 : index
    %c0_6 = arith.constant 0 : index
    %5 = vector.load %arg5[%c0_4, %c0_5, %c0_6] : memref<2x8x128xf32, #tpu.memory_space<vmem>>, vector<1x8x128xf32>
    %6 = vector.shape_cast %5 : vector<1x8x128xf32> to vector<8x128xf32>
    %7 = vector.shape_cast %3 : vector<8x128xf32> to vector<1x8x128xf32>
    tpu.vector_store %arg5[%c0_4, %c0_5, %c0_6], %7 {strides = array<i32>} : memref<2x8x128xf32, #tpu.memory_space<vmem>>, vector<1x8x128xf32>,
    %c0_7 = arith.constant 0 : index
    %c0_8 = arith.constant 0 : index
    %c0_9 = arith.constant 0 : index
    %8 = vector.load %arg4[%c0_7, %c0_8, %c0_9] : memref<2x8x128xf32, #tpu.memory_space<vmem>>, vector<1x8x128xf32>
    %9 = vector.shape_cast %8 : vector<1x8x128xf32> to vector<8x128xf32>
    %10 = vector.shape_cast %4 : vector<8x128xf32> to vector<1x8x128xf32>
    tpu.vector_store %arg4[%c0_7, %c0_8, %c0_9], %10 {strides = array<i32>} : memref<2x8x128xf32, #tpu.memory_space<vmem>>, vector<1x8x128xf32>,
    %c1 = arith.constant 1 : index
    %c0_10 = arith.constant 0 : index
    %c0_11 = arith.constant 0 : index
    %11 = vector.load %arg3[%c1, %c0_10, %c0_11] : memref<2x8x128xf32, #tpu.memory_space<vmem>>, vector<1x8x128xf32>
    %12 = vector.shape_cast %11 : vector<1x8x128xf32> to vector<8x128xf32>
    %cst_12 = arith.constant dense<0.000000e+00> : vector<8x128xf32>
    %13 = tpu.matmul %0, %12, %cst_12 {dimension_numbers = #tpu.dot_dimension_numbers<[1], [0], [0], [1], [0, 0, 1, 1], [], []>} : vector<8x8xf32>, vector<8x128xf32>, vector<8x128xf32> -> vector<8x128xf32>
    %14 = arith.subf %12, %13 : vector<8x128xf32>
    %c1_13 = arith.constant 1 : index
    %c0_14 = arith.constant 0 : index
    %c0_15 = arith.constant 0 : index
    %15 = vector.load %arg5[%c1_13, %c0_14, %c0_15] : memref<2x8x128xf32, #tpu.memory_space<vmem>>, vector<1x8x128xf32>
    %16 = vector.shape_cast %15 : vector<1x8x128xf32> to vector<8x128xf32>
    %17 = vector.shape_cast %13 : vector<8x128xf32> to vector<1x8x128xf32>
    tpu.vector_store %arg5[%c1_13, %c0_14, %c0_15], %17 {strides = array<i32>} : memref<2x8x128xf32, #tpu.memory_space<vmem>>, vector<1x8x128xf32>,
    %c1_16 = arith.constant 1 : index
    %c0_17 = arith.constant 0 : index
    %c0_18 = arith.constant 0 : index
    %18 = vector.load %arg4[%c1_16, %c0_17, %c0_18] : memref<2x8x128xf32, #tpu.memory_space<vmem>>, vector<1x8x128xf32>
    %19 = vector.shape_cast %18 : vector<1x8x128xf32> to vector<8x128xf32>
    %20 = vector.shape_cast %14 : vector<8x128xf32> to vector<1x8x128xf32>
    tpu.vector_store %arg4[%c1_16, %c0_17, %c0_18], %20 {strides = array<i32>} : memref<2x8x128xf32, #tpu.memory_space<vmem>>, vector<1x8x128xf32>,
    return
  }
  func.func @transform_0(%arg0: i32, %arg1: i32) -> (i32, i32) {
    %c0_i32 = arith.constant 0 : i32
    %c0_i32_0 = arith.constant 0 : i32
    %c0_i32_1 = arith.constant 0 : i32
    return %c0_i32, %c0_i32_0 : i32, i32
  }
  func.func @transform_1(%arg0: i32, %arg1: i32) -> (i32, i32, i32) {
    %c0_i32 = arith.constant 0 : i32
    %c0_i32_0 = arith.constant 0 : i32
    return %arg0, %c0_i32, %arg1 : i32, i32, i32
  }
  func.func @transform_2(%arg0: i32, %arg1: i32) -> (i32, i32, i32) {
    %c0_i32 = arith.constant 0 : i32
    %c0_i32_0 = arith.constant 0 : i32
    return %arg0, %c0_i32, %arg1 : i32, i32, i32
  }
  func.func @transform_3(%arg0: i32, %arg1: i32) -> (i32, i32, i32) {
    %c0_i32 = arith.constant 0 : i32
    %c0_i32_0 = arith.constant 0 : i32
    return %arg0, %c0_i32, %arg1 : i32, i32, i32
  }
}

</mosaic_0001>

<llo_original>
// kernel: tpu_custom_call.1
$region0: #{tpu_custom_call.1}
  #allocation0 [shape = 'u32[]', space=smem, size = 0x4, offset = 0x4, fixed_abs, tag = 'smem constant byte address 0x4 - core index']
  #allocation1 [shape = 'u32[144,128]{1,0:T(1,128)}', space=vmem, size = 0x12000, scoped, tag = 'internal scratch']
  %s0 = inlined_call_operand.vmem [shape: f32[8,8], index: 0, kind: input, shape index: {}]
  %s1 = inlined_call_operand.vmem [shape: f32[2,8,4], index: 1, kind: input, shape index: {}]
  %s2 = inlined_call_operand.vmem [shape: f32[2,8,4], index: 2, kind: output, shape index: {0}]
  %s3 = inlined_call_operand.vmem [shape: f32[2,8,4], index: 3, kind: output, shape index: {1}]
  %4 = xla_tuple %s2, %s3
  %s5 = sld [smem:[#allocation0]]
  $region26: #{tpu_custom_call.1} parent=0
    _
  %s7 = ssub.s32 1, %s5
  %s8 = scalar_select 0, %s7, %s5
  // Predicated region
  $region2: #{tpu_custom_call.1} parent=0 // pred_check
    _
  $region3: #{tpu_custom_call.1} parent=0 // pred_check_branch
    %10 = sbr.rel (0) target = $region5
  $region4: #{tpu_custom_call.1} parent=0 // pred_region
    _
  $region5: #{tpu_custom_call.1} parent=0 // pred_fallthru
    _
  // Predicated region
  $region6: #{tpu_custom_call.1} parent=0 // pred_check
    _
  $region7: #{tpu_custom_call.1} parent=0 // pred_check_branch
    %12 = sbr.rel (0) target = $region9
  $region8: #{tpu_custom_call.1} parent=0 // pred_region
    _
  $region9: #{tpu_custom_call.1} parent=0 // pred_fallthru
    _
  %v13 = vld [vmem:[%s0] sm:$0xff]
  %v14 = vld [vmem:[%s1] sm:$0xff]
  %vm15 = vcmask 64512
  %v17 = vsel %vm15, %v13, 0
  %19 = vmatprep.subr.mxu0 0.0
  %20 = vmatpush1.msra.mxu0 %v14
  %21 = vmatprep.subr.mxu0 0.0
  %22 = vmatpush1.msra.mxu0 0.0
  %23 = vmatprep.subr.mxu0 0.0
  %24 = vmatpush1.msra.mxu0 0.0
  %25 = vmatprep.subr.mxu0 0.0
  %26 = vmatpush1.msra.mxu0 0.0
  %27 = vmatprep.subr.mxu0 0.0
  %28 = vmatpush1.msra.mxu0 0.0
  %29 = vmatprep.subr.mxu0 0.0
  %30 = vmatpush1.msra.mxu0 0.0
  %31 = vmatprep.subr.mxu0 0.0
  %32 = vmatpush1.msra.mxu0 0.0
  %33 = vmatprep.subr.mxu0 0.0
  %34 = vmatpush1.msra.mxu0 0.0
  %35 = vmatprep.subr.mxu0 0.0
  %36 = vmatpush1.msra.mxu0 0.0
  %37 = vmatprep.subr.mxu0 0.0
  %38 = vmatpush1.msra.mxu0 0.0
  %39 = vmatprep.subr.mxu0 0.0
  %40 = vmatpush1.msra.mxu0 0.0
  %41 = vmatprep.subr.mxu0 0.0
  %42 = vmatpush1.msra.mxu0 0.0
  %43 = vmatprep.subr.mxu0 0.0
  %44 = vmatpush1.msra.mxu0 0.0
  %45 = vmatprep.subr.mxu0 0.0
  %46 = vmatpush1.msra.mxu0 0.0
  %47 = vmatprep.subr.mxu0 0.0
  %48 = vmatpush1.msra.mxu0 0.0
  %49 = vmatprep.subr.mxu0 0.0
  %50 = vmatpush1.msra.mxu0 0.0
  %51 = vmatprep.subr.mxu0 0.0
  %52 = vmatpush1.msra.mxu0 0.0
  %53 = vmatprep.subr.mxu0 0.0
  %54 = vmatpush1.msra.mxu0 0.0
  %55 = vmatprep.subr.mxu0 0.0
  %56 = vmatpush1.msra.mxu0 0.0
  %57 = vmatprep.subr.mxu0 0.0
  %58 = vmatpush1.msra.mxu0 0.0
  %59 = vmatprep.subr.mxu0 0.0
  %60 = vmatpush1.msra.mxu0 0.0
  %61 = vmatprep.subr.mxu0 0.0
  %62 = vmatpush1.msra.mxu0 0.0
  %63 = vmatprep.subr.mxu0 0.0
  %64 = vmatpush1.msra.mxu0 0.0
  %65 = vmatprep.subr.mxu0 0.0
  %66 = vmatpush1.msra.mxu0 0.0
  %67 = vmatprep.subr.mxu0 0.0
  %68 = vmatpush1.msra.mxu0 0.0
  %69 = vmatprep.subr.mxu0 0.0
  %70 = vmatpush1.msra.mxu0 0.0
  %71 = vmatprep.subr.mxu0 0.0
  %72 = vmatpush1.msra.mxu0 0.0
  %73 = vmatprep.subr.mxu0 0.0
  %74 = vmatpush1.msra.mxu0 0.0
  %75 = vmatprep.subr.mxu0 0.0
  %76 = vmatpush1.msra.mxu0 0.0
  %77 = vmatprep.subr.mxu0 0.0
  %78 = vmatpush1.msra.mxu0 0.0
  %79 = vmatprep.subr.mxu0 0.0
  %80 = vmatpush1.msra.mxu0 0.0
  %81 = vmatprep.subr.mxu0 0.0
  %82 = vmatpush1.msra.mxu0 0.0
  %83 = vmatprep.mubr.f32.mxu0 0.0
  %84 = vmatmul.mubr.f32.gmra.mrb[0].mxu0 %v17
  %v85 = vpop.f32.mrb[0].mxu0
  %v86 = vadd.f32 0.0, %v85
  %v87 = vpop.f32.mrb[0].mxu0
  %88 = vdwg.mxu0
  %v89 = vsub.f32 %v14, %v86
  %90 = vst [vmem:[%s3] sm:$0xff] %v86
  %91 = vst [vmem:[%s2] sm:$0xff] %v89
  %s92 = scalar_lea.vmem %s1, 8
  %v93 = vld [vmem:[%s92] sm:$0xff]
  %94 = vmatprep.subr.mxu0 0.0
  %95 = vmatpush1.msra.mxu0 %v93
  %96 = vmatprep.subr.mxu0 0.0
  %97 = vmatpush1.msra.mxu0 0.0
  %98 = vmatprep.subr.mxu0 0.0
  %99 = vmatpush1.msra.mxu0 0.0
  %100 = vmatprep.subr.mxu0 0.0
  %101 = vmatpush1.msra.mxu0 0.0
  %102 = vmatprep.subr.mxu0 0.0
  %103 = vmatpush1.msra.mxu0 0.0
  %104 = vmatprep.subr.mxu0 0.0
  %105 = vmatpush1.msra.mxu0 0.0
  %106 = vmatprep.subr.mxu0 0.0
  %107 = vmatpush1.msra.mxu0 0.0
  %108 = vmatprep.subr.mxu0 0.0
  %109 = vmatpush1.msra.mxu0 0.0
  %110 = vmatprep.subr.mxu0 0.0
  %111 = vmatpush1.msra.mxu0 0.0
  %112 = vmatprep.subr.mxu0 0.0
  %113 = vmatpush1.msra.mxu0 0.0
  %114 = vmatprep.subr.mxu0 0.0
  %115 = vmatpush1.msra.mxu0 0.0
  %116 = vmatprep.subr.mxu0 0.0
  %117 = vmatpush1.msra.mxu0 0.0
  %118 = vmatprep.subr.mxu0 0.0
  %119 = vmatpush1.msra.mxu0 0.0
  %120 = vmatprep.subr.mxu0 0.0
  %121 = vmatpush1.msra.mxu0 0.0
  %122 = vmatprep.subr.mxu0 0.0
  %123 = vmatpush1.msra.mxu0 0.0
  %124 = vmatprep.subr.mxu0 0.0
  %125 = vmatpush1.msra.mxu0 0.0
  %126 = vmatprep.subr.mxu0 0.0
  %127 = vmatpush1.msra.mxu0 0.0
  %128 = vmatprep.subr.mxu0 0.0
  %129 = vmatpush1.msra.mxu0 0.0
  %130 = vmatprep.subr.mxu0 0.0
  %131 = vmatpush1.msra.mxu0 0.0
  %132 = vmatprep.subr.mxu0 0.0
  %133 = vmatpush1.msra.mxu0 0.0
  %134 = vmatprep.subr.mxu0 0.0
  %135 = vmatpush1.msra.mxu0 0.0
  %136 = vmatprep.subr.mxu0 0.0
  %137 = vmatpush1.msra.mxu0 0.0
  %138 = vmatprep.subr.mxu0 0.0
  %139 = vmatpush1.msra.mxu0 0.0
  %140 = vmatprep.subr.mxu0 0.0
  %141 = vmatpush1.msra.mxu0 0.0
  %142 = vmatprep.subr.mxu0 0.0
  %143 = vmatpush1.msra.mxu0 0.0
  %144 = vmatprep.subr.mxu0 0.0
  %145 = vmatpush1.msra.mxu0 0.0
  %146 = vmatprep.subr.mxu0 0.0
  %147 = vmatpush1.msra.mxu0 0.0
  %148 = vmatprep.subr.mxu0 0.0
  %149 = vmatpush1.msra.mxu0 0.0
  %150 = vmatprep.subr.mxu0 0.0
  %151 = vmatpush1.msra.mxu0 0.0
  %152 = vmatprep.subr.mxu0 0.0
  %153 = vmatpush1.msra.mxu0 0.0
  %154 = vmatprep.subr.mxu0 0.0
  %155 = vmatpush1.msra.mxu0 0.0
  %156 = vmatprep.subr.mxu0 0.0
  %157 = vmatpush1.msra.mxu0 0.0
  %158 = vmatprep.mubr.f32.mxu0 0.0
  %159 = vmatmul.mubr.f32.gmra.mrb[0].mxu0 %v17
  %v160 = vpop.f32.mrb[0].mxu0
  %v161 = vadd.f32 0.0, %v160
  %v162 = vpop.f32.mrb[0].mxu0
  %163 = vdwg.mxu0
  %v164 = vsub.f32 %v93, %v161
  %s165 = scalar_lea.vmem %s3, 8
  %166 = vst [vmem:[%s165] sm:$0xff] %v161
  %s167 = scalar_lea.vmem %s2, 8
  %168 = vst [vmem:[%s167] sm:$0xff] %v164
  // Predicated region
  $region10: #{tpu_custom_call.1} parent=0 // pred_check
    _
  $region11: #{tpu_custom_call.1} parent=0 // pred_check_branch
    %170 = sbr.rel (0) target = $region13
  $region12: #{tpu_custom_call.1} parent=0 // pred_region
    _
  $region13: #{tpu_custom_call.1} parent=0 // pred_fallthru
    _
  // Predicated region
  $region14: #{tpu_custom_call.1} parent=0 // pred_check
    _
  $region15: #{tpu_custom_call.1} parent=0 // pred_check_branch
    %172 = sbr.rel (0) target = $region17
  $region16: #{tpu_custom_call.1} parent=0 // pred_region
    _
  $region17: #{tpu_custom_call.1} parent=0 // pred_fallthru
    _
  // Predicated region
  $region18: #{tpu_custom_call.1} parent=0 // pred_check
    _
  $region19: #{tpu_custom_call.1} parent=0 // pred_check_branch
    %174 = sbr.rel (0) target = $region21
  $region20: #{tpu_custom_call.1} parent=0 // pred_region
    _
  $region21: #{tpu_custom_call.1} parent=0 // pred_fallthru
    _
  // Predicated region
  $region22: #{tpu_custom_call.1} parent=0 // pred_check
    _
  $region23: #{tpu_custom_call.1} parent=0 // pred_check_branch
    %176 = sbr.rel (0) target = $region25
  $region24: #{tpu_custom_call.1} parent=0 // pred_region
    _
  $region25: #{tpu_custom_call.1} parent=0 // pred_fallthru
    _

</llo_original>
